<compile_context>
chip_gen: v7x
topology: tpu7x:2x2x1
jax: 0.10.0
libtpu: 0.0.40
codegen_flags: <defaults>
</compile_context>

<pallas_src>
import functools
import math

import jax
import jax.numpy as jnp
from jax.experimental import pallas as pl
from jax.experimental.pallas import tpu as pltpu


def _round_up(a, b):
    return (a + b - 1) // b * b


# ----------------------------------------------------------------------------
# Fused Pallas kernel: out = PReLU(GDN(A @ B))
#   A: (TM, TK) bf16   im2col patches tile
#   B: (TK, Np) bf16   flattened conv weight tile (channels padded to Np)
#   g: (Np, Np) f32    GDN gamma (zero-padded)
#   beta: (1, Np) f32  GDN beta (padded with 1.0)
#   alpha: (1, 1) f32  PReLU slope
# ----------------------------------------------------------------------------
def _conv_gdn_prelu_kernel(a_ref, b_ref, g_ref, beta_ref, alpha_ref,
                           o_ref, acc_ref):
    k = pl.program_id(1)

    @pl.when(k == 0)
    def _():
        acc_ref[...] = jnp.zeros_like(acc_ref)

    # bf16 x bf16 -> f32 accumulate on the MXU.
    acc_ref[...] += jnp.dot(a_ref[...], b_ref[...],
                            preferred_element_type=jnp.float32)

    @pl.when(k == pl.num_programs(1) - 1)
    def _():
        xc = acc_ref[...]                                     # conv output (f32)
        # GDN: norm[:, i] = beta_i + sum_j gamma[j, i] * x_j^2
        norm = jnp.dot(xc * xc, g_ref[...],
                       preferred_element_type=jnp.float32) + beta_ref[...]
        y = xc * jax.lax.rsqrt(norm)
        a = alpha_ref[0, 0]                                   # PReLU slope
        o_ref[...] = jnp.where(y >= 0.0, y, a * y)


def _fused_conv_gdn_prelu_matmul(A, Bm, gamma, beta, prelu_alpha, oc):
    """A: (M, K) f32, Bm: (K, OC) f32 -> (M, OC) f32, fused GDN+PReLU."""
    M, K = A.shape

    # Tile sizes (sweepable; bigger TM amortizes per-step overhead on v6e/v7x).
    if M >= 4096:
        TM = 512
    elif M >= 1024:
        TM = 256
    else:
        TM = 128
    TK = min(512, _round_up(K, 128))

    M_pad = _round_up(M, TM)
    K_pad = _round_up(K, TK)
    N_pad = _round_up(oc, 128)        # lane-dense output channels

    # Zero-pad + cast MXU operands to bf16 (halves HBM/VMEM traffic, bf16 MXU).
    A_p = jnp.zeros((M_pad, K_pad), jnp.bfloat16).at[:M, :K].set(
        A.astype(jnp.bfloat16))
    B_p = jnp.zeros((K_pad, N_pad), jnp.bfloat16).at[:K, :oc].set(
        Bm.astype(jnp.bfloat16))
    # Padded GDN params: gamma zero outside real channels, beta = 1 there so
    # rsqrt stays finite (padded channels are exactly zero and sliced away).
    g_p = jnp.zeros((N_pad, N_pad), jnp.float32).at[:oc, :oc].set(gamma)
    beta_p = jnp.ones((1, N_pad), jnp.float32).at[0, :oc].set(beta)
    alpha_p = jnp.full((1, 1), prelu_alpha, jnp.float32)

    grid = (M_pad // TM, K_pad // TK)
    out = pl.pallas_call(
        _conv_gdn_prelu_kernel,
        grid=grid,
        in_specs=[
            pl.BlockSpec((TM, TK), lambda i, k: (i, k)),        # A tile
            pl.BlockSpec((TK, N_pad), lambda i, k: (k, 0)),     # B tile
            pl.BlockSpec((N_pad, N_pad), lambda i, k: (0, 0)),  # gamma
            pl.BlockSpec((1, N_pad), lambda i, k: (0, 0)),      # beta
            pl.BlockSpec((1, 1), lambda i, k: (0, 0)),          # prelu alpha
        ],
        out_specs=pl.BlockSpec((TM, N_pad), lambda i, k: (i, 0)),
        out_shape=jax.ShapeDtypeStruct((M_pad, N_pad), jnp.float32),
        scratch_shapes=[pltpu.VMEM((TM, N_pad), jnp.float32)],
        compiler_params=pltpu.CompilerParams(
            dimension_semantics=("parallel", "arbitrary"),
            vmem_limit_bytes=32 * 1024 * 1024),
    )(A_p, B_p, g_p, beta_p, alpha_p)

    return out[:M, :oc]


# ----------------------------------------------------------------------------
# conv_block forward: Conv2d(bias=False) -> GDN -> PReLU
# ----------------------------------------------------------------------------
def conv_block_forward(x, w, gamma, beta, prelu_alpha, stride=1, padding=1):
    # x: (N, C, H, W) NCHW; w: (OC, IC, KH, KW) PyTorch layout.
    N, C, H, W = x.shape
    OC, IC, KH, KW = w.shape
    assert IC == C

    # im2col (JAX glue). Column order = ic-major, then (kh, kw) -- identical
    # to PyTorch's w.reshape(OC, IC*KH*KW) flattening.
    xp = jnp.pad(x, ((0, 0), (0, 0), (padding, padding), (padding, padding)))
    Hp, Wp = H + 2 * padding, W + 2 * padding
    OH = (Hp - KH) // stride + 1
    OW = (Wp - KW) // stride + 1
    patches = []
    for ki in range(KH):
        for kj in range(KW):
            patches.append(
                xp[:, :, ki:ki + (OH - 1) * stride + 1:stride,
                      kj:kj + (OW - 1) * stride + 1:stride])
    p = jnp.stack(patches, axis=2)                       # (N, C, KH*KW, OH, OW)
    A = p.reshape(N, C * KH * KW, OH, OW).transpose(0, 2, 3, 1)
    A = A.reshape(N * OH * OW, C * KH * KW)              # (M, K)
    Bm = w.reshape(OC, IC * KH * KW).T                   # (K, OC)

    out2d = _fused_conv_gdn_prelu_matmul(A, Bm, gamma, beta, prelu_alpha, OC)
    return out2d.reshape(N, OH, OW, OC).transpose(0, 3, 1, 2)


# Pure-JAX reference (f32) for validation only.
def conv_block_ref(x, w, gamma, beta, prelu_alpha, stride=1, padding=1):
    out = jax.lax.conv_general_dilated(
        x, w, window_strides=(stride, stride),
        padding=((padding, padding), (padding, padding)),
        dimension_numbers=("NCHW", "OIHW", "NCHW"))
    norm = jnp.einsum("nchw,cd->ndhw", out * out, gamma) \
        + beta[None, :, None, None]
    y = out * jax.lax.rsqrt(norm)
    return jnp.where(y >= 0.0, y, prelu_alpha * y)


# ----------------------------------------------------------------------------
if __name__ == "__main__":
    key = jax.random.PRNGKey(0)
    k_x, k_w = jax.random.split(key)

    # conv_block(in_channels=4, out_channels=32, kernel_size=3, stride=1, padding=1)
    N, Cin, H, W = 2, 4, 16, 16
    OC, ks, stride, padding = 32, 3, 1, 1

    x = jax.random.uniform(k_x, (N, Cin, H, W), jnp.float32)
    w = jax.random.normal(k_w, (OC, Cin, ks, ks), jnp.float32) \
        / math.sqrt(Cin * ks * ks)
    gamma = 0.1 * jnp.eye(OC, dtype=jnp.float32)     # GDN gamma init
    beta = jnp.ones((OC,), jnp.float32)              # GDN beta init
    prelu_alpha = jnp.float32(0.25)                  # nn.PReLU() default

    out = conv_block_forward(x, w, gamma, beta, prelu_alpha, stride, padding)
    out = jax.block_until_ready(out)

    assert out.shape == (N, OC, H, W), out.shape
    assert bool(jnp.all(jnp.isfinite(out)))

    ref = conv_block_ref(x, w, gamma, beta, prelu_alpha, stride, padding)
    max_err = float(jnp.max(jnp.abs(out - ref)))
    # bf16 MXU operands vs. f32 reference -> ~1e-2 scale tolerance.
    assert max_err < 5e-2, f"max abs err vs reference: {max_err}"

    print("KERNEL_OK")
</pallas_src>

<mosaic_0001>
module attributes {stable_mosaic.version = 11 : i64} {
  func.func @_conv_gdn_prelu_kernel(%arg0: i32, %arg1: i32, %arg2: memref<128x128xbf16, #tpu.memory_space<vmem>>, %arg3: memref<128x128xbf16, #tpu.memory_space<vmem>>, %arg4: memref<128x128xf32, #tpu.memory_space<vmem>>, %arg5: memref<1x128xf32, #tpu.memory_space<vmem>>, %arg6: memref<1x1xf32, #tpu.memory_space<vmem>>, %arg7: memref<128x128xf32, #tpu.memory_space<vmem>>, %arg8: memref<128x128xf32, #tpu.memory_space<vmem>>) attributes {dimension_semantics = [#tpu.dimension_semantics<parallel>, #tpu.dimension_semantics<arbitrary>], iteration_bounds = array<i64: 4, 1>, scalar_prefetch = 0 : i64, scratch_operands = 1 : i64, tpu.core_type = #tpu.core_type<tc>, window_params = [{transform_indices = @transform_0, window_bounds = array<i64: 128, 128>}, {transform_indices = @transform_1, window_bounds = array<i64: 128, 128>}, {pipeline_mode = #tpu.pipeline_mode<synchronous>, transform_indices = @transform_2, window_bounds = array<i64: 128, 128>}, {pipeline_mode = #tpu.pipeline_mode<synchronous>, transform_indices = @transform_3, window_bounds = array<i64: 1, 128>}, {pipeline_mode = #tpu.pipeline_mode<synchronous>, transform_indices = @transform_4, window_bounds = array<i64: 1, 1>}, {transform_indices = @transform_5, window_bounds = array<i64: 128, 128>}]} {
    %c0_i32 = arith.constant 0 : i32
    %0 = arith.cmpi eq, %arg1, %c0_i32 : i32
    %1 = arith.extui %0 : i1 to i32
    %c0_i32_0 = arith.constant 0 : i32
    %2 = arith.cmpi ne, %1, %c0_i32_0 : i32
    scf.if %2 {
      %cst_10 = arith.constant 0.000000e+00 : f32
      %12 = vector.broadcast %cst_10 : f32 to vector<128x128xf32>
      %c0_11 = arith.constant 0 : index
      %c0_12 = arith.constant 0 : index
      %13 = vector.load %arg8[%c0_11, %c0_12] : memref<128x128xf32, #tpu.memory_space<vmem>>, vector<128x128xf32>
      tpu.vector_store %arg8[%c0_11, %c0_12], %12 {strides = array<i32>} : memref<128x128xf32, #tpu.memory_space<vmem>>, vector<128x128xf32>,
    } else {
    }
    %c0 = arith.constant 0 : index
    %c0_1 = arith.constant 0 : index
    %3 = vector.load %arg8[%c0, %c0_1] : memref<128x128xf32, #tpu.memory_space<vmem>>, vector<128x128xf32>
    %c0_2 = arith.constant 0 : index
    %c0_3 = arith.constant 0 : index
    %4 = vector.load %arg2[%c0_2, %c0_3] : memref<128x128xbf16, #tpu.memory_space<vmem>>, vector<128x128xbf16>
    %c0_4 = arith.constant 0 : index
    %c0_5 = arith.constant 0 : index
    %5 = vector.load %arg3[%c0_4, %c0_5] : memref<128x128xbf16, #tpu.memory_space<vmem>>, vector<128x128xbf16>
    %cst = arith.constant dense<0.000000e+00> : vector<128x128xf32>
    %6 = tpu.matmul %4, %5, %cst {dimension_numbers = #tpu.dot_dimension_numbers<[1], [0], [0], [1], [0, 0, 1, 1], [], []>} : vector<128x128xbf16>, vector<128x128xbf16>, vector<128x128xf32> -> vector<128x128xf32>
    %7 = arith.addf %3, %6 : vector<128x128xf32>
    %c0_6 = arith.constant 0 : index
    %c0_7 = arith.constant 0 : index
    %8 = vector.load %arg8[%c0_6, %c0_7] : memref<128x128xf32, #tpu.memory_space<vmem>>, vector<128x128xf32>
    tpu.vector_store %arg8[%c0_6, %c0_7], %7 {strides = array<i32>} : memref<128x128xf32, #tpu.memory_space<vmem>>, vector<128x128xf32>,
    %c0_i32_8 = arith.constant 0 : i32
    %9 = arith.cmpi eq, %arg1, %c0_i32_8 : i32
    %10 = arith.extui %9 : i1 to i32
    %c0_i32_9 = arith.constant 0 : i32
    %11 = arith.cmpi ne, %10, %c0_i32_9 : i32
    scf.if %11 {
      %c0_10 = arith.constant 0 : index
      %c0_11 = arith.constant 0 : index
      %12 = vector.load %arg8[%c0_10, %c0_11] : memref<128x128xf32, #tpu.memory_space<vmem>>, vector<128x128xf32>
      %13 = arith.mulf %12, %12 : vector<128x128xf32>
      %c0_12 = arith.constant 0 : index
      %c0_13 = arith.constant 0 : index
      %14 = vector.load %arg4[%c0_12, %c0_13] : memref<128x128xf32, #tpu.memory_space<vmem>>, vector<128x128xf32>
      %cst_14 = arith.constant dense<0.000000e+00> : vector<128x128xf32>
      %15 = tpu.matmul %13, %14, %cst_14 {dimension_numbers = #tpu.dot_dimension_numbers<[1], [0], [0], [1], [0, 0, 1, 1], [], []>} : vector<128x128xf32>, vector<128x128xf32>, vector<128x128xf32> -> vector<128x128xf32>
      %c0_15 = arith.constant 0 : index
      %c0_16 = arith.constant 0 : index
      %16 = vector.load %arg5[%c0_15, %c0_16] : memref<1x128xf32, #tpu.memory_space<vmem>>, vector<1x128xf32>
      %17 = vector.broadcast %16 : vector<1x128xf32> to vector<128x128xf32>
      %18 = arith.addf %15, %17 : vector<128x128xf32>
      %19 = math.rsqrt %18 : vector<128x128xf32>
      %20 = arith.mulf %12, %19 : vector<128x128xf32>
      %c0_17 = arith.constant 0 : index
      %c0_18 = arith.constant 0 : index
      %21 = vector.load %arg6[%c0_17, %c0_18] : memref<1x1xf32, #tpu.memory_space<vmem>>, vector<1x1xf32>
      %22 = vector.extract %21[0, 0] : f32 from vector<1x1xf32>
      %cst_19 = arith.constant 0.000000e+00 : f32
      %23 = vector.broadcast %cst_19 : f32 to vector<128x128xf32>
      %24 = arith.cmpf oge, %20, %23 : vector<128x128xf32>
      %25 = vector.broadcast %22 : f32 to vector<128x128xf32>
      %26 = arith.mulf %25, %20 : vector<128x128xf32>
      %27 = arith.select %24, %20, %26 : vector<128x128xi1>, vector<128x128xf32>
      %c0_20 = arith.constant 0 : index
      %c0_21 = arith.constant 0 : index
      %28 = vector.load %arg7[%c0_20, %c0_21] : memref<128x128xf32, #tpu.memory_space<vmem>>, vector<128x128xf32>
      tpu.vector_store %arg7[%c0_20, %c0_21], %27 {strides = array<i32>} : memref<128x128xf32, #tpu.memory_space<vmem>>, vector<128x128xf32>,
    } else {
    }
    return
  }
  func.func @transform_0(%arg0: i32, %arg1: i32) -> (i32, i32) {
    %c0_i32 = arith.constant 0 : i32
    return %arg0, %arg1 : i32, i32
  }
  func.func @transform_1(%arg0: i32, %arg1: i32) -> (i32, i32) {
    %c0_i32 = arith.constant 0 : i32
    %c0_i32_0 = arith.constant 0 : i32
    return %arg1, %c0_i32 : i32, i32
  }
  func.func @transform_2(%arg0: i32, %arg1: i32) -> (i32, i32) {
    %c0_i32 = arith.constant 0 : i32
    %c0_i32_0 = arith.constant 0 : i32
    %c0_i32_1 = arith.constant 0 : i32
    return %c0_i32, %c0_i32_0 : i32, i32
  }
  func.func @transform_3(%arg0: i32, %arg1: i32) -> (i32, i32) {
    %c0_i32 = arith.constant 0 : i32
    %c0_i32_0 = arith.constant 0 : i32
    %c0_i32_1 = arith.constant 0 : i32
    return %c0_i32, %c0_i32_0 : i32, i32
  }
  func.func @transform_4(%arg0: i32, %arg1: i32) -> (i32, i32) {
    %c0_i32 = arith.constant 0 : i32
    %c0_i32_0 = arith.constant 0 : i32
    %c0_i32_1 = arith.constant 0 : i32
    return %c0_i32, %c0_i32_0 : i32, i32
  }
  func.func @transform_5(%arg0: i32, %arg1: i32) -> (i32, i32) {
    %c0_i32 = arith.constant 0 : i32
    %c0_i32_0 = arith.constant 0 : i32
    return %arg0, %c0_i32 : i32, i32
  }
}

</mosaic_0001>

<llo_original>
// kernel: tpu_custom_call.1
$region0: #{tpu_custom_call.1}
  #allocation0 [shape = 'u32[]', space=smem, size = 0x4, offset = 0x4, fixed_abs, tag = 'smem constant byte address 0x4 - core index']
  #allocation1 [shape = 'u32[144,128]{1,0:T(1,128)}', space=vmem, size = 0x12000, scoped, tag = 'internal scratch']
  #allocation2 [shape = 'f32[128,128]{1,0:T(8,128)}', space=vmem, size = 0x10000, scoped, tag = 'scratch operand']
  #allocation3 [shape = 'f32[1,1]{1,0:T(1,128)S(1)}', space=vmem, size = 0x200, scoped, tag = 'scoped memory for tpu_custom_call.1']
  %s0 = inlined_call_operand.hbm [shape: bf16[512,128], index: 0, kind: input, shape index: {}]
  %s1 = inlined_call_operand.hbm [shape: bf16[128,128], index: 1, kind: input, shape index: {}]
  %s2 = inlined_call_operand.hbm [shape: f32[128,128], index: 2, kind: input, shape index: {}]
  %s3 = inlined_call_operand.vmem [shape: f32[1,128], index: 3, kind: input, shape index: {}]
  %s4 = inlined_call_operand.<no memory space> [shape: f32[1,1], index: 4, kind: input, shape index: {}]
  %s5 = inlined_call_operand.hbm [shape: f32[512,128], index: 5, kind: output, shape index: {}]
  %s6 = sld [smem:[#allocation0]]
  $region73: #{tpu_custom_call.1} parent=0
    _
  %s8 = ssub.s32 1, %s6
  %s9 = scalar_select 0, %s8, %s6
  %v10 = vstv %s4
  %11 = vst [vmem:[#allocation3] sm:$0x1] %v10
  $region1: #{tpu_custom_call.1} parent=0
    #allocation4 [shape = 'u8[65536]{0}', space=vmem, size = 0x10000, scoped, tag = 'input window, operand 0']
    #allocation5 [shape = 's32[2]{0}', space=sflag, size = 0x8, scoped, tag = 'scoped memory for tpu_custom_call.1']
    #allocation6 [shape = 's32[2]{0}', space=sflag, size = 0x8, scoped, tag = 'scoped memory for tpu_custom_call.1']
    #allocation7 [shape = 'u8[32768]{0}', space=vmem, size = 0x8000, scoped, tag = 'input window, operand 1, single buffered']
    #allocation8 [shape = 's32[1]{0}', space=sflag, size = 0x4, scoped, tag = 'scoped memory for tpu_custom_call.1']
    #allocation9 [shape = 'u8[65536]{0}', space=vmem, size = 0x10000, scoped, tag = 'input window, operand 2, single buffered']
    #allocation10 [shape = 'u8[131072]{0}', space=vmem, size = 0x20000, scoped, tag = 'output window, operand 0']
    %12 = vsyncpa [#allocation5], 0
    %s13 = scalar_lea.sflag [#allocation5], 1
    %14 = vsyncpa %s13, 0
    %15 = vsyncpa [#allocation8], 0
    %16 = vsyncpa [#allocation6], 0
    %s17 = scalar_lea.sflag [#allocation6], 1
    %18 = vsyncpa %s17, 0
    loop: start=0, step=1, limit=6
    $region2: #{tpu_custom_call.1} parent=1 // loop_pre_header
      _
    $region3: #{tpu_custom_call.1} parent=1 // loop_header
      %s20 = sphi 0, %s24
      %p21 = scmp.ge.s32.totalorder %s20, 6
      %s27 = sphi 0, %s39
      %s28 = sphi 0, %s35
      %s29 = sphi 0, %s27
      %s30 = sphi 0, %s28
      %s31 = sphi 0, %s29
      %s32 = sphi 0, %s30
      %s44 = sphi 0, %s46
      %s47 = sphi 0, %s44
      %s48 = sphi 0, %s47
      %s64 = sphi 0, %s48
      %s70 = sphi 0, %s72
      %s73 = sphi 0, %s70
      %s74 = sphi 0, %s73
      %s90 = sphi 0, %s74
      %s94 = sphi 0, %s94
      %s96 = sphi 0, %s94
      %s97 = sphi 0, %s96
      %s111 = sphi 0, %s97
      %s115 = sphi 0, %s115
      %s117 = sphi 0, %s115
      %s118 = sphi 0, %s117
      %s132 = sphi 0, %s118
      %s136 = sphi 0, %s136
      %s138 = sphi 0, %s136
      %s139 = sphi 0, %s138
      %s153 = sphi 0, %s139
      %s159 = sphi 0, %s161
      %s162 = sphi 0, %s159
      %s163 = sphi 0, %s162
      %s179 = sphi 0, %s163
    $region4: #{tpu_custom_call.1} parent=1 // loop_header_branch
      %23 = sbr.rel (%p21) target = $region8
    $region5: #{tpu_custom_call.1} parent=1 // loop_body
      %s25 = ssub.s32 %s20, 1
      %s26 = ssub.s32 %s20, 2
      %s33 = sadd.s32 1, %s28
      %p34 = scmp.ge.s32.totalorder %s33, 1
      %s35 = scalar_select %p34, 0, %s33
      %s36 = sadd.s32 1, %s27
      %s37 = scalar_select %p34, %s36, %s27
      %p38 = scmp.ge.s32.totalorder %s37, 4
      %s39 = scalar_select %p38, 0, %s37
      %s40 = ssub.s32 %s27, %s39
      %s41 = ssub.s32 %s28, %s35
      %s42 = sor.u32 %s40, %s41
      %p43 = scmp.eq.s32.totalorder %s42, 0
      %s45 = sadd.s32 %s44, 1
      %s46 = scalar_select %p43, %s44, %s45
      %p49 = pneg %p43
      %p50 = scmp.eq.s32.totalorder %s20, 3
      %p51 = por %p49, %p50
      %p52 = scmp.ne.s32.totalorder %s44, %s47
      %p53 = scmp.eq.s32.totalorder %s20, 0
      %p54 = por %p52, %p53
      %p55 = scmp.ne.s32.totalorder %s44, %s47
      %p56 = scmp.eq.s32.totalorder %s25, 3
      %p57 = por %p55, %p56
      %p58 = scmp.ne.s32.totalorder %s47, %s48
      %p59 = scmp.eq.s32.totalorder %s25, 0
      %p60 = por %p58, %p59
      %p61 = scmp.ne.s32.totalorder %s47, %s48
      %p62 = scmp.eq.s32.totalorder %s26, 3
      %p63 = por %p61, %p62
      %p65 = scmp.ne.s32.totalorder %s48, %s64
      %p66 = scmp.eq.s32.totalorder %s26, 0
      %p67 = por %p65, %p66
      %s68 = ssub.s32 %s28, %s35
      %p69 = scmp.eq.s32.totalorder %s68, 0
      %s71 = sadd.s32 %s70, 1
      %s72 = scalar_select %p69, %s70, %s71
      %p75 = pneg %p69
      %p76 = scmp.eq.s32.totalorder %s20, 3
      %p77 = por %p75, %p76
      %p78 = scmp.ne.s32.totalorder %s70, %s73
      %p79 = scmp.eq.s32.totalorder %s20, 0
      %p80 = por %p78, %p79
      %p81 = scmp.ne.s32.totalorder %s70, %s73
      %p82 = scmp.eq.s32.totalorder %s25, 3
      %p83 = por %p81, %p82
      %p84 = scmp.ne.s32.totalorder %s73, %s74
      %p85 = scmp.eq.s32.totalorder %s25, 0
      %p86 = por %p84, %p85
      %p87 = scmp.ne.s32.totalorder %s73, %s74
      %p88 = scmp.eq.s32.totalorder %s26, 3
      %p89 = por %p87, %p88
      %p91 = scmp.ne.s32.totalorder %s74, %s90
      %p92 = scmp.eq.s32.totalorder %s26, 0
      %p93 = por %p91, %p92
      %s95 = sadd.s32 %s94, 1
      %p98 = scmp.eq.s32.totalorder %s20, 3
      %p99 = scmp.ne.s32.totalorder %s94, %s96
      %p100 = scmp.eq.s32.totalorder %s20, 0
      %p101 = por %p99, %p100
      %p102 = scmp.ne.s32.totalorder %s94, %s96
      %p103 = scmp.eq.s32.totalorder %s25, 3
      %p104 = por %p102, %p103
      %p105 = scmp.ne.s32.totalorder %s96, %s97
      %p106 = scmp.eq.s32.totalorder %s25, 0
      %p107 = por %p105, %p106
      %p108 = scmp.ne.s32.totalorder %s96, %s97
      %p109 = scmp.eq.s32.totalorder %s26, 3
      %p110 = por %p108, %p109
      %p112 = scmp.ne.s32.totalorder %s97, %s111
      %p113 = scmp.eq.s32.totalorder %s26, 0
      %p114 = por %p112, %p113
      %s116 = sadd.s32 %s115, 1
      %p119 = scmp.eq.s32.totalorder %s20, 3
      %p120 = scmp.ne.s32.totalorder %s115, %s117
      %p121 = scmp.eq.s32.totalorder %s20, 0
      %p122 = por %p120, %p121
      %p123 = scmp.ne.s32.totalorder %s115, %s117
      %p124 = scmp.eq.s32.totalorder %s25, 3
      %p125 = por %p123, %p124
      %p126 = scmp.ne.s32.totalorder %s117, %s118
      %p127 = scmp.eq.s32.totalorder %s25, 0
      %p128 = por %p126, %p127
      %p129 = scmp.ne.s32.totalorder %s117, %s118
      %p130 = scmp.eq.s32.totalorder %s26, 3
      %p131 = por %p129, %p130
      %p133 = scmp.ne.s32.totalorder %s118, %s132
      %p134 = scmp.eq.s32.totalorder %s26, 0
      %p135 = por %p133, %p134
      %s137 = sadd.s32 %s136, 1
      %p140 = scmp.eq.s32.totalorder %s20, 3
      %p141 = scmp.ne.s32.totalorder %s136, %s138
      %p142 = scmp.eq.s32.totalorder %s20, 0
      %p143 = por %p141, %p142
      %p144 = scmp.ne.s32.totalorder %s136, %s138
      %p145 = scmp.eq.s32.totalorder %s25, 3
      %p146 = por %p144, %p145
      %p147 = scmp.ne.s32.totalorder %s138, %s139
      %p148 = scmp.eq.s32.totalorder %s25, 0
      %p149 = por %p147, %p148
      %p150 = scmp.ne.s32.totalorder %s138, %s139
      %p151 = scmp.eq.s32.totalorder %s26, 3
      %p152 = por %p150, %p151
      %p154 = scmp.ne.s32.totalorder %s139, %s153
      %p155 = scmp.eq.s32.totalorder %s26, 0
      %p156 = por %p154, %p155
      %s157 = ssub.s32 %s27, %s39
      %p158 = scmp.eq.s32.totalorder %s157, 0
      %s160 = sadd.s32 %s159, 1
      %s161 = scalar_select %p158, %s159, %s160
      %p164 = pneg %p158
      %p165 = scmp.eq.s32.totalorder %s20, 3
      %p166 = por %p164, %p165
      %p167 = scmp.ne.s32.totalorder %s159, %s162
      %p168 = scmp.eq.s32.totalorder %s20, 0
      %p169 = por %p167, %p168
      %p170 = scmp.ne.s32.totalorder %s159, %s162
      %p171 = scmp.eq.s32.totalorder %s25, 3
      %p172 = por %p170, %p171
      %p173 = scmp.ne.s32.totalorder %s162, %s163
      %p174 = scmp.eq.s32.totalorder %s25, 0
      %p175 = por %p173, %p174
      %p176 = scmp.ne.s32.totalorder %s162, %s163
      %p177 = scmp.eq.s32.totalorder %s26, 3
      %p178 = por %p176, %p177
      %p180 = scmp.ne.s32.totalorder %s163, %s179
      %p181 = scmp.eq.s32.totalorder %s26, 0
      %p182 = por %p180, %p181
      %p183 = scmp.le.s32.totalorder 1, %s20
      %p184 = scmp.lt.s32.totalorder %s20, 5
      %p185 = pnand %p183, %p184
      %p186 = pneg %p185
      // Predicated region
      $region9: #{tpu_custom_call.1} parent=5 // pred_check
        _
      $region10: #{tpu_custom_call.1} parent=5 // pred_check_branch
        %188 = sbr.rel (%p185) target = $region12
      $region11: #{tpu_custom_call.1} parent=5 // pred_region
        %s189 = ssub.s32 %s20, 1
        // Predicated region
        $region13: #{tpu_custom_call.1} parent=11 // pred_check
          %p190 = pneg %p86
        $region14: #{tpu_custom_call.1} parent=11 // pred_check_branch
          %192 = sbr.rel (%p190) target = $region16
        $region15: #{tpu_custom_call.1} parent=11 // pred_region
          %s193 = smul.u32 16, %s30
          %s195 = ssub.s32 1024, 1024
          %196 = vsyncadd [#allocation8], %s195
          %s197 = smul.addr %s193, 64
          %s198 = scalar_lea.hbm %s1, %s197
          %s199 = sshll.u32 [#allocation7], 4
          %s200 = int_to_ptr.vmem [resolvable:$true] %s199
          %205 = dma.hbm_to_vmem [thread:$0]  %s198, 1024, %s200, [#allocation8], 64, 64, 4
        $region16: #{tpu_custom_call.1} parent=11 // pred_fallthru
          _
        // Predicated region
        $region17: #{tpu_custom_call.1} parent=11 // pred_check
          %p206 = pneg %p107
        $region18: #{tpu_custom_call.1} parent=11 // pred_check_branch
          %208 = sbr.rel (%p206) target = $region20
        $region19: #{tpu_custom_call.1} parent=11 // pred_region
          %s210 = ssub.s32 2048, 2048
          %211 = vsyncadd [#allocation8], %s210
          %s212 = sshll.u32 [#allocation9], 4
          %s213 = int_to_ptr.vmem [resolvable:$true] %s212
          %218 = dma.hbm_to_vmem [thread:$0]  %s2, 2048, %s213, [#allocation8], 128, 128, 8
        $region20: #{tpu_custom_call.1} parent=11 // pred_fallthru
          _
        // Predicated region
        $region21: #{tpu_custom_call.1} parent=11 // pred_check
          %p219 = pneg %p128
        $region22: #{tpu_custom_call.1} parent=11 // pred_check_branch
          %221 = sbr.rel (%p219) target = $region24
        $region23: #{tpu_custom_call.1} parent=11 // pred_region
          _
        $region24: #{tpu_custom_call.1} parent=11 // pred_fallthru
          _
        // Predicated region
        $region25: #{tpu_custom_call.1} parent=11 // pred_check
          %p222 = pneg %p149
        $region26: #{tpu_custom_call.1} parent=11 // pred_check_branch
          %224 = sbr.rel (%p222) target = $region28
        $region27: #{tpu_custom_call.1} parent=11 // pred_region
          _
        $region28: #{tpu_custom_call.1} parent=11 // pred_fallthru
          _
      $region12: #{tpu_custom_call.1} parent=5 // pred_fallthru
        _
      %p225 = scmp.lt.s32.totalorder %s20, 4
      // Predicated region
      $region29: #{tpu_custom_call.1} parent=5 // pred_check
        %p226 = pneg %p225
      $region30: #{tpu_custom_call.1} parent=5 // pred_check_branch
        %228 = sbr.rel (%p226) target = $region32
      $region31: #{tpu_custom_call.1} parent=5 // pred_region
        // Predicated region
        $region33: #{tpu_custom_call.1} parent=31 // pred_check
          %p229 = pneg %p54
        $region34: #{tpu_custom_call.1} parent=31 // pred_check_branch
          %231 = sbr.rel (%p229) target = $region36
        $region35: #{tpu_custom_call.1} parent=31 // pred_region
          %s232 = sand.u32 %s44, 1
          %s233 = scalar_lea.sflag [#allocation5], %s232
          %s234 = sand.u32 %s44, 1
          %s235 = smul.addr %s234, 64
          %s236 = scalar_lea.vmem [#allocation4], %s235
          %s237 = smul.u32 16, %s27
          %s239 = ssub.s32 1024, 1024
          %240 = vsyncadd %s233, %s239
          %s241 = sadd.s32 %s28, %s237
          %s242 = smul.addr %s241, 64
          %s243 = scalar_lea.hbm %s0, %s242
          %s244 = sshll.u32 %s236, 4
          %s245 = int_to_ptr.vmem [resolvable:$true] %s244
          %250 = dma.hbm_to_vmem [thread:$0]  %s243, 1024, %s245, %s233, 64, 64, 4
        $region36: #{tpu_custom_call.1} parent=31 // pred_fallthru
          _
      $region32: #{tpu_custom_call.1} parent=5 // pred_fallthru
        _
      %p251 = scmp.le.s32.totalorder 1, %s20
      %p252 = scmp.lt.s32.totalorder %s20, 5
      %p253 = pnand %p251, %p252
      %p254 = pneg %p253
      // Predicated region
      $region37: #{tpu_custom_call.1} parent=5 // pred_check
        _
      $region38: #{tpu_custom_call.1} parent=5 // pred_check_branch
        %256 = sbr.rel (%p253) target = $region40
      $region39: #{tpu_custom_call.1} parent=5 // pred_region
        %s257 = ssub.s32 %s20, 1
        %s258 = sand.u32 %s47, 1
        %s259 = scalar_lea.sflag [#allocation5], %s258
        %s260 = sand.u32 %s47, 1
        %s261 = smul.addr %s260, 64
        %s262 = scalar_lea.vmem [#allocation4], %s261
        // Predicated region
        $region41: #{tpu_custom_call.1} parent=39 // pred_check
          %p263 = pneg %p60
        $region42: #{tpu_custom_call.1} parent=39 // pred_check_branch
          %265 = sbr.rel (%p263) target = $region44
        $region43: #{tpu_custom_call.1} parent=39 // pred_region
          %266 = dma.done %s259, 1024
        $region44: #{tpu_custom_call.1} parent=39 // pred_fallthru
          _
        // Predicated region
        $region45: #{tpu_custom_call.1} parent=39 // pred_check
          %p267 = pneg %p86
        $region46: #{tpu_custom_call.1} parent=39 // pred_check_branch
          %269 = sbr.rel (%p267) target = $region48
        $region47: #{tpu_custom_call.1} parent=39 // pred_region
          %270 = dma.done [#allocation8], 1024
        $region48: #{tpu_custom_call.1} parent=39 // pred_fallthru
          _
        // Predicated region
        $region49: #{tpu_custom_call.1} parent=39 // pred_check
          %p271 = pneg %p107
        $region50: #{tpu_custom_call.1} parent=39 // pred_check_branch
          %273 = sbr.rel (%p271) target = $region52
        $region51: #{tpu_custom_call.1} parent=39 // pred_region
          %274 = dma.done [#allocation8], 2048
        $region52: #{tpu_custom_call.1} parent=39 // pred_fallthru
          _
        %s275 = sand.u32 %s47, 1
        %s276 = scalar_lea.sflag [#allocation5], %s275
        %s277 = sand.u32 %s47, 1
        %s278 = smul.addr %s277, 64
        %s279 = scalar_lea.vmem [#allocation4], %s278
        %p280 = pneg %p60
        %p281 = pneg %p57
        %p282 = pneg %p86
        %p283 = pneg %p83
        %p284 = pneg %p107
        %p285 = pneg %p104
        %p286 = pneg %p128
        %p287 = pneg %p125
        %p288 = pneg %p149
        %p289 = pneg %p146
        %p290 = pneg %p175
        %p291 = pneg %p172
        %s292 = sand.u32 %s162, 1
        %s293 = scalar_lea.sflag [#allocation6], %s292
        %s294 = sand.u32 %s162, 1
        %s295 = smul.addr %s294, 128
        %s296 = scalar_lea.vmem [#allocation10], %s295
        %s297 = smul.u32 16, %s29
        %s298 = smul.u32 16, %s30
        %s299 = smul.u32 16, %s29
        %p301 = scmp.eq.s32.totalorder %s30, 0
        // Predicated region
        $region53: #{tpu_custom_call.1} parent=39 // pred_check
          %p302 = pneg %p301
        $region54: #{tpu_custom_call.1} parent=39 // pred_check_branch
          %304 = sbr.rel (%p302) target = $region56
        $region55: #{tpu_custom_call.1} parent=39 // pred_region
          %305 = vst [vmem:[#allocation2] sm:$0xff] 0.0
          %306 = vst [vmem:[#allocation2 + $0x8] sm:$0xff] 0.0
          %307 = vst [vmem:[#allocation2 + $0x10] sm:$0xff] 0.0
          %308 = vst [vmem:[#allocation2 + $0x18] sm:$0xff] 0.0
          %309 = vst [vmem:[#allocation2 + $0x20] sm:$0xff] 0.0
          %310 = vst [vmem:[#allocation2 + $0x28] sm:$0xff] 0.0
          %311 = vst [vmem:[#allocation2 + $0x30] sm:$0xff] 0.0
          %312 = vst [vmem:[#allocation2 + $0x38] sm:$0xff] 0.0
          %313 = vst [vmem:[#allocation2 + $0x40] sm:$0xff] 0.0
          %314 = vst [vmem:[#allocation2 + $0x48] sm:$0xff] 0.0
          %315 = vst [vmem:[#allocation2 + $0x50] sm:$0xff] 0.0
          %316 = vst [vmem:[#allocation2 + $0x58] sm:$0xff] 0.0
          %317 = vst [vmem:[#allocation2 + $0x60] sm:$0xff] 0.0
          %318 = vst [vmem:[#allocation2 + $0x68] sm:$0xff] 0.0
          %319 = vst [vmem:[#allocation2 + $0x70] sm:$0xff] 0.0
          %320 = vst [vmem:[#allocation2 + $0x78] sm:$0xff] 0.0
        $region56: #{tpu_custom_call.1} parent=39 // pred_fallthru
          _
        %v321 = vld [vmem:[#allocation2] sm:$0xff]
        %v322 = vld [vmem:[#allocation2 + $0x8] sm:$0xff]
        %v323 = vld [vmem:[#allocation2 + $0x10] sm:$0xff]
        %v324 = vld [vmem:[#allocation2 + $0x18] sm:$0xff]
        %v325 = vld [vmem:[#allocation2 + $0x20] sm:$0xff]
        %v326 = vld [vmem:[#allocation2 + $0x28] sm:$0xff]
        %v327 = vld [vmem:[#allocation2 + $0x30] sm:$0xff]
        %v328 = vld [vmem:[#allocation2 + $0x38] sm:$0xff]
        %v329 = vld [vmem:[#allocation2 + $0x40] sm:$0xff]
        %v330 = vld [vmem:[#allocation2 + $0x48] sm:$0xff]
        %v331 = vld [vmem:[#allocation2 + $0x50] sm:$0xff]
        %v332 = vld [vmem:[#allocation2 + $0x58] sm:$0xff]
        %v333 = vld [vmem:[#allocation2 + $0x60] sm:$0xff]
        %v334 = vld [vmem:[#allocation2 + $0x68] sm:$0xff]
        %v335 = vld [vmem:[#allocation2 + $0x70] sm:$0xff]
        %v336 = vld [vmem:[#allocation2 + $0x78] sm:$0xff]
        %v337 = vld [vmem:[%s262] sm:$0xf]
        %v338 = vld [vmem:[%s262 + $0x4] sm:$0xf]
        %v339 = vld [vmem:[%s262 + $0x8] sm:$0xf]
        %v340 = vld [vmem:[%s262 + $0xc] sm:$0xf]
        %v341 = vld [vmem:[%s262 + $0x10] sm:$0xf]
        %v342 = vld [vmem:[%s262 + $0x14] sm:$0xf]
        %v343 = vld [vmem:[%s262 + $0x18] sm:$0xf]
        %v344 = vld [vmem:[%s262 + $0x1c] sm:$0xf]
        %v345 = vld [vmem:[%s262 + $0x20] sm:$0xf]
        %v346 = vld [vmem:[%s262 + $0x24] sm:$0xf]
        %v347 = vld [vmem:[%s262 + $0x28] sm:$0xf]
        %v348 = vld [vmem:[%s262 + $0x2c] sm:$0xf]
        %v349 = vld [vmem:[%s262 + $0x30] sm:$0xf]
        %v350 = vld [vmem:[%s262 + $0x34] sm:$0xf]
        %v351 = vld [vmem:[%s262 + $0x38] sm:$0xf]
        %v352 = vld [vmem:[%s262 + $0x3c] sm:$0xf]
        %v353 = vld [vmem:[#allocation7] sm:$0xf]
        %v354 = vld [vmem:[#allocation7 + $0x4] sm:$0xf]
        %v355 = vld [vmem:[#allocation7 + $0x8] sm:$0xf]
        %v356 = vld [vmem:[#allocation7 + $0xc] sm:$0xf]
        %v357 = vld [vmem:[#allocation7 + $0x10] sm:$0xf]
        %v358 = vld [vmem:[#allocation7 + $0x14] sm:$0xf]
        %v359 = vld [vmem:[#allocation7 + $0x18] sm:$0xf]
        %v360 = vld [vmem:[#allocation7 + $0x1c] sm:$0xf]
        %v361 = vld [vmem:[#allocation7 + $0x20] sm:$0xf]
        %v362 = vld [vmem:[#allocation7 + $0x24] sm:$0xf]
        %v363 = vld [vmem:[#allocation7 + $0x28] sm:$0xf]
        %v364 = vld [vmem:[#allocation7 + $0x2c] sm:$0xf]
        %v365 = vld [vmem:[#allocation7 + $0x30] sm:$0xf]
        %v366 = vld [vmem:[#allocation7 + $0x34] sm:$0xf]
        %v367 = vld [vmem:[#allocation7 + $0x38] sm:$0xf]
        %v368 = vld [vmem:[#allocation7 + $0x3c] sm:$0xf]
        %v385 = vunpack.c.l.b16 %v337
        %v386 = vunpack.c.l.b16 %v338
        %v387 = vunpack.c.l.b16 %v339
        %v388 = vunpack.c.l.b16 %v340
        %v389 = vunpack.c.l.b16 %v341
        %v390 = vunpack.c.l.b16 %v342
        %v391 = vunpack.c.l.b16 %v343
        %v392 = vunpack.c.l.b16 %v344
        %v393 = vunpack.c.l.b16 %v345
        %v394 = vunpack.c.l.b16 %v346
        %v395 = vunpack.c.l.b16 %v347
        %v396 = vunpack.c.l.b16 %v348
        %v397 = vunpack.c.l.b16 %v349
        %v398 = vunpack.c.l.b16 %v350
        %v399 = vunpack.c.l.b16 %v351
        %v400 = vunpack.c.l.b16 %v352
        %v401 = vpack.c.b16 %v386, %v385
        %v402 = vpack.c.b16 %v388, %v387
        %v403 = vpack.c.b16 %v390, %v389
        %v404 = vpack.c.b16 %v392, %v391
        %v405 = vpack.c.b16 %v394, %v393
        %v406 = vpack.c.b16 %v396, %v395
        %v407 = vpack.c.b16 %v398, %v397
        %v408 = vpack.c.b16 %v400, %v399
        %v433 = vunpack.c.l.b16 %v353
        %v434 = vunpack.c.l.b16 %v354
        %v435 = vunpack.c.l.b16 %v355
        %v436 = vunpack.c.l.b16 %v356
        %v437 = vunpack.c.l.b16 %v357
        %v438 = vunpack.c.l.b16 %v358
        %v439 = vunpack.c.l.b16 %v359
        %v440 = vunpack.c.l.b16 %v360
        %v441 = vunpack.c.l.b16 %v361
        %v442 = vunpack.c.l.b16 %v362
        %v443 = vunpack.c.l.b16 %v363
        %v444 = vunpack.c.l.b16 %v364
        %v445 = vunpack.c.l.b16 %v365
        %v446 = vunpack.c.l.b16 %v366
        %v447 = vunpack.c.l.b16 %v367
        %v448 = vunpack.c.l.b16 %v368
        %v449 = vpack.c.b16 %v434, %v433
        %v450 = vpack.c.b16 %v436, %v435
        %v451 = vpack.c.b16 %v438, %v437
        %v452 = vpack.c.b16 %v440, %v439
        %v453 = vpack.c.b16 %v442, %v441
        %v454 = vpack.c.b16 %v444, %v443
        %v455 = vpack.c.b16 %v446, %v445
        %v456 = vpack.c.b16 %v448, %v447
        %465 = vmatprep.subr.bf16.mxu0 0
        %466 = vmatpush1.bf16.msra.mxu0 %v449
        %467 = vmatprep.subr.bf16.mxu0 0
        %468 = vmatpush1.bf16.msra.mxu0 %v450
        %469 = vmatprep.subr.bf16.mxu0 0
        %470 = vmatpush1.bf16.msra.mxu0 %v451
        %471 = vmatprep.subr.bf16.mxu0 0
        %472 = vmatpush1.bf16.msra.mxu0 %v452
        %473 = vmatprep.subr.bf16.mxu0 0
        %474 = vmatpush1.bf16.msra.mxu0 %v453
        %475 = vmatprep.subr.bf16.mxu0 0
        %476 = vmatpush1.bf16.msra.mxu0 %v454
        %477 = vmatprep.subr.bf16.mxu0 0
        %478 = vmatpush1.bf16.msra.mxu0 %v455
        %479 = vmatprep.subr.bf16.mxu0 0
        %480 = vmatpush1.bf16.msra.mxu0 %v456
        %481 = vmatprep.subr.bf16.mxu0 0
        %482 = vmatpush1.bf16.msra.mxu0 0
        %483 = vmatprep.subr.bf16.mxu0 0
        %484 = vmatpush1.bf16.msra.mxu0 0
        %485 = vmatprep.subr.bf16.mxu0 0
        %486 = vmatpush1.bf16.msra.mxu0 0
        %487 = vmatprep.subr.bf16.mxu0 0
        %488 = vmatpush1.bf16.msra.mxu0 0
        %489 = vmatprep.subr.bf16.mxu0 0
        %490 = vmatpush1.bf16.msra.mxu0 0
        %491 = vmatprep.subr.bf16.mxu0 0
        %492 = vmatpush1.bf16.msra.mxu0 0
        %493 = vmatprep.subr.bf16.mxu0 0
        %494 = vmatpush1.bf16.msra.mxu0 0
        %495 = vmatprep.subr.bf16.mxu0 0
        %496 = vmatpush1.bf16.msra.mxu0 0
        %497 = vmatprep.mubr.bf16.mxu0 0
        %498 = vmatmul.mubr.bf16.gmra.mrb[0].mxu0 %v401
        %v499 = vpop.f32.mrb[0].mxu0
        %v500 = vadd.f32 0.0, %v499
        %v501 = vpop.f32.mrb[0].mxu0
        %v502 = vpop.f32.mrb[0].mxu0
        %v503 = vadd.f32 0.0, %v502
        %v504 = vpop.f32.mrb[0].mxu0
        %505 = vmatprep.mubr.bf16.mxu0 0
        %506 = vmatmul.mubr.bf16.gmra.mrb[0].mxu0 %v402
        %v507 = vpop.f32.mrb[0].mxu0
        %v508 = vadd.f32 0.0, %v507
        %v509 = vpop.f32.mrb[0].mxu0
        %v510 = vpop.f32.mrb[0].mxu0
        %v511 = vadd.f32 0.0, %v510
        %v512 = vpop.f32.mrb[0].mxu0
        %513 = vmatprep.mubr.bf16.mxu0 0
        %514 = vmatmul.mubr.bf16.gmra.mrb[0].mxu0 %v403
        %v515 = vpop.f32.mrb[0].mxu0
        %v516 = vadd.f32 0.0, %v515
        %v517 = vpop.f32.mrb[0].mxu0
        %v518 = vpop.f32.mrb[0].mxu0
        %v519 = vadd.f32 0.0, %v518
        %v520 = vpop.f32.mrb[0].mxu0
        %521 = vmatprep.mubr.bf16.mxu0 0
        %522 = vmatmul.mubr.bf16.gmra.mrb[0].mxu0 %v404
        %v523 = vpop.f32.mrb[0].mxu0
        %v524 = vadd.f32 0.0, %v523
        %v525 = vpop.f32.mrb[0].mxu0
        %v526 = vpop.f32.mrb[0].mxu0
        %v527 = vadd.f32 0.0, %v526
        %v528 = vpop.f32.mrb[0].mxu0
        %529 = vmatprep.mubr.bf16.mxu0 0
        %530 = vmatmul.mubr.bf16.gmra.mrb[0].mxu0 %v405
        %v531 = vpop.f32.mrb[0].mxu0
        %v532 = vadd.f32 0.0, %v531
        %v533 = vpop.f32.mrb[0].mxu0
        %v534 = vpop.f32.mrb[0].mxu0
        %v535 = vadd.f32 0.0, %v534
        %v536 = vpop.f32.mrb[0].mxu0
        %537 = vmatprep.mubr.bf16.mxu0 0
        %538 = vmatmul.mubr.bf16.gmra.mrb[0].mxu0 %v406
        %v539 = vpop.f32.mrb[0].mxu0
        %v540 = vadd.f32 0.0, %v539
        %v541 = vpop.f32.mrb[0].mxu0
        %v542 = vpop.f32.mrb[0].mxu0
        %v543 = vadd.f32 0.0, %v542
        %v544 = vpop.f32.mrb[0].mxu0
        %545 = vmatprep.mubr.bf16.mxu0 0
        %546 = vmatmul.mubr.bf16.gmra.mrb[0].mxu0 %v407
        %v547 = vpop.f32.mrb[0].mxu0
        %v548 = vadd.f32 0.0, %v547
        %v549 = vpop.f32.mrb[0].mxu0
        %v550 = vpop.f32.mrb[0].mxu0
        %v551 = vadd.f32 0.0, %v550
        %v552 = vpop.f32.mrb[0].mxu0
        %553 = vmatprep.mubr.bf16.mxu0 0
        %554 = vmatmul.mubr.bf16.gmra.mrb[0].mxu0 %v408
        %v555 = vpop.f32.mrb[0].mxu0
        %v556 = vadd.f32 0.0, %v555
        %v557 = vpop.f32.mrb[0].mxu0
        %v558 = vpop.f32.mrb[0].mxu0
        %v559 = vadd.f32 0.0, %v558
        %v560 = vpop.f32.mrb[0].mxu0
        %561 = vdwg.mxu0
        %v562 = vadd.f32 %v321, %v500
        %v563 = vadd.f32 %v322, %v503
        %v564 = vadd.f32 %v323, %v508
        %v565 = vadd.f32 %v324, %v511
        %v566 = vadd.f32 %v325, %v516
        %v567 = vadd.f32 %v326, %v519
        %v568 = vadd.f32 %v327, %v524
        %v569 = vadd.f32 %v328, %v527
        %v570 = vadd.f32 %v329, %v532
        %v571 = vadd.f32 %v330, %v535
        %v572 = vadd.f32 %v331, %v540
        %v573 = vadd.f32 %v332, %v543
        %v574 = vadd.f32 %v333, %v548
        %v575 = vadd.f32 %v334, %v551
        %v576 = vadd.f32 %v335, %v556
        %v577 = vadd.f32 %v336, %v559
        %578 = vst [vmem:[#allocation2] sm:$0xff] %v562
        %579 = vst [vmem:[#allocation2 + $0x8] sm:$0xff] %v563
        %580 = vst [vmem:[#allocation2 + $0x10] sm:$0xff] %v564
        %581 = vst [vmem:[#allocation2 + $0x18] sm:$0xff] %v565
        %582 = vst [vmem:[#allocation2 + $0x20] sm:$0xff] %v566
        %583 = vst [vmem:[#allocation2 + $0x28] sm:$0xff] %v567
        %584 = vst [vmem:[#allocation2 + $0x30] sm:$0xff] %v568
        %585 = vst [vmem:[#allocation2 + $0x38] sm:$0xff] %v569
        %586 = vst [vmem:[#allocation2 + $0x40] sm:$0xff] %v570
        %587 = vst [vmem:[#allocation2 + $0x48] sm:$0xff] %v571
        %588 = vst [vmem:[#allocation2 + $0x50] sm:$0xff] %v572
        %589 = vst [vmem:[#allocation2 + $0x58] sm:$0xff] %v573
        %590 = vst [vmem:[#allocation2 + $0x60] sm:$0xff] %v574
        %591 = vst [vmem:[#allocation2 + $0x68] sm:$0xff] %v575
        %592 = vst [vmem:[#allocation2 + $0x70] sm:$0xff] %v576
        %593 = vst [vmem:[#allocation2 + $0x78] sm:$0xff] %v577
        // Predicated region
        $region57: #{tpu_custom_call.1} parent=39 // pred_check
          %p594 = pneg %p301
        $region58: #{tpu_custom_call.1} parent=39 // pred_check_branch
          %596 = sbr.rel (%p594) target = $region60
        $region59: #{tpu_custom_call.1} parent=39 // pred_region
          %v597 = vld [vmem:[#allocation2] sm:$0xff]
          %v598 = vld [vmem:[#allocation2 + $0x8] sm:$0xff]
          %v599 = vld [vmem:[#allocation2 + $0x10] sm:$0xff]
          %v600 = vld [vmem:[#allocation2 + $0x18] sm:$0xff]
          %v601 = vld [vmem:[#allocation2 + $0x20] sm:$0xff]
          %v602 = vld [vmem:[#allocation2 + $0x28] sm:$0xff]
          %v603 = vld [vmem:[#allocation2 + $0x30] sm:$0xff]
          %v604 = vld [vmem:[#allocation2 + $0x38] sm:$0xff]
          %v605 = vld [vmem:[#allocation2 + $0x40] sm:$0xff]
          %v606 = vld [vmem:[#allocation2 + $0x48] sm:$0xff]
          %v607 = vld [vmem:[#allocation2 + $0x50] sm:$0xff]
          %v608 = vld [vmem:[#allocation2 + $0x58] sm:$0xff]
          %v609 = vld [vmem:[#allocation2 + $0x60] sm:$0xff]
          %v610 = vld [vmem:[#allocation2 + $0x68] sm:$0xff]
          %v611 = vld [vmem:[#allocation2 + $0x70] sm:$0xff]
          %v612 = vld [vmem:[#allocation2 + $0x78] sm:$0xff]
          %v613 = vmul.f32 %v597, %v597
          %v614 = vmul.f32 %v598, %v598
          %v615 = vmul.f32 %v599, %v599
          %v616 = vmul.f32 %v600, %v600
          %v617 = vmul.f32 %v601, %v601
          %v618 = vmul.f32 %v602, %v602
          %v619 = vmul.f32 %v603, %v603
          %v620 = vmul.f32 %v604, %v604
          %v621 = vmul.f32 %v605, %v605
          %v622 = vmul.f32 %v606, %v606
          %v623 = vmul.f32 %v607, %v607
          %v624 = vmul.f32 %v608, %v608
          %v625 = vmul.f32 %v609, %v609
          %v626 = vmul.f32 %v610, %v610
          %v627 = vmul.f32 %v611, %v611
          %v628 = vmul.f32 %v612, %v612
          %v629 = vld [vmem:[#allocation9] sm:$0xff]
          %v630 = vld [vmem:[#allocation9 + $0x8] sm:$0xff]
          %v631 = vld [vmem:[#allocation9 + $0x10] sm:$0xff]
          %v632 = vld [vmem:[#allocation9 + $0x18] sm:$0xff]
          %v633 = vld [vmem:[#allocation9 + $0x20] sm:$0xff]
          %v634 = vld [vmem:[#allocation9 + $0x28] sm:$0xff]
          %v635 = vld [vmem:[#allocation9 + $0x30] sm:$0xff]
          %v636 = vld [vmem:[#allocation9 + $0x38] sm:$0xff]
          %v637 = vld [vmem:[#allocation9 + $0x40] sm:$0xff]
          %v638 = vld [vmem:[#allocation9 + $0x48] sm:$0xff]
          %v639 = vld [vmem:[#allocation9 + $0x50] sm:$0xff]
          %v640 = vld [vmem:[#allocation9 + $0x58] sm:$0xff]
          %v641 = vld [vmem:[#allocation9 + $0x60] sm:$0xff]
          %v642 = vld [vmem:[#allocation9 + $0x68] sm:$0xff]
          %v643 = vld [vmem:[#allocation9 + $0x70] sm:$0xff]
          %v644 = vld [vmem:[#allocation9 + $0x78] sm:$0xff]
          %v645 = vld [vmem:[%s3] sm:$0x1]
          %v647 = vlaneseq
          %v648 = vshrl.u32 %v647, 7
          %v649 = vsub.s32 0, %v648
          %v650 = vrot.slane %v645, %v649
          %652 = vmatprep.subr.mxu0 0.0
          %653 = vmatpush1.msra.mxu0 %v629
          %654 = vmatprep.subr.mxu0 0.0
          %655 = vmatpush1.msra.mxu0 %v630
          %656 = vmatprep.subr.mxu0 0.0
          %657 = vmatpush1.msra.mxu0 %v631
          %658 = vmatprep.subr.mxu0 0.0
          %659 = vmatpush1.msra.mxu0 %v632
          %660 = vmatprep.subr.mxu0 0.0
          %661 = vmatpush1.msra.mxu0 %v633
          %662 = vmatprep.subr.mxu0 0.0
          %663 = vmatpush1.msra.mxu0 %v634
          %664 = vmatprep.subr.mxu0 0.0
          %665 = vmatpush1.msra.mxu0 %v635
          %666 = vmatprep.subr.mxu0 0.0
          %667 = vmatpush1.msra.mxu0 %v636
          %668 = vmatprep.subr.mxu0 0.0
          %669 = vmatpush1.msra.mxu0 %v637
          %670 = vmatprep.subr.mxu0 0.0
          %671 = vmatpush1.msra.mxu0 %v638
          %672 = vmatprep.subr.mxu0 0.0
          %673 = vmatpush1.msra.mxu0 %v639
          %674 = vmatprep.subr.mxu0 0.0
          %675 = vmatpush1.msra.mxu0 %v640
          %676 = vmatprep.subr.mxu0 0.0
          %677 = vmatpush1.msra.mxu0 %v641
          %678 = vmatprep.subr.mxu0 0.0
          %679 = vmatpush1.msra.mxu0 %v642
          %680 = vmatprep.subr.mxu0 0.0
          %681 = vmatpush1.msra.mxu0 %v643
          %682 = vmatprep.subr.mxu0 0.0
          %683 = vmatpush1.msra.mxu0 %v644
          %684 = vmatprep.subr.mxu0 0.0
          %685 = vmatpush1.msra.mxu0 0.0
          %686 = vmatprep.subr.mxu0 0.0
          %687 = vmatpush1.msra.mxu0 0.0
          %688 = vmatprep.subr.mxu0 0.0
          %689 = vmatpush1.msra.mxu0 0.0
          %690 = vmatprep.subr.mxu0 0.0
          %691 = vmatpush1.msra.mxu0 0.0
          %692 = vmatprep.subr.mxu0 0.0
          %693 = vmatpush1.msra.mxu0 0.0
          %694 = vmatprep.subr.mxu0 0.0
          %695 = vmatpush1.msra.mxu0 0.0
          %696 = vmatprep.subr.mxu0 0.0
          %697 = vmatpush1.msra.mxu0 0.0
          %698 = vmatprep.subr.mxu0 0.0
          %699 = vmatpush1.msra.mxu0 0.0
          %700 = vmatprep.subr.mxu0 0.0
          %701 = vmatpush1.msra.mxu0 0.0
          %702 = vmatprep.subr.mxu0 0.0
          %703 = vmatpush1.msra.mxu0 0.0
          %704 = vmatprep.subr.mxu0 0.0
          %705 = vmatpush1.msra.mxu0 0.0
          %706 = vmatprep.subr.mxu0 0.0
          %707 = vmatpush1.msra.mxu0 0.0
          %708 = vmatprep.subr.mxu0 0.0
          %709 = vmatpush1.msra.mxu0 0.0
          %710 = vmatprep.subr.mxu0 0.0
          %711 = vmatpush1.msra.mxu0 0.0
          %712 = vmatprep.subr.mxu0 0.0
          %713 = vmatpush1.msra.mxu0 0.0
          %714 = vmatprep.subr.mxu0 0.0
          %715 = vmatpush1.msra.mxu0 0.0
          %716 = vmatprep.mubr.f32.mxu0 0.0
          %717 = vmatmul.mubr.f32.gmra.mrb[0].mxu0 %v613
          %v718 = vpop.f32.mrb[0].mxu0
          %v719 = vadd.f32 %v650, %v718
          %v720 = vpop.f32.mrb[0].mxu0
          %721 = vmatprep.mubr.f32.mxu0 0.0
          %722 = vmatmul.mubr.f32.gmra.mrb[0].mxu0 %v614
          %v723 = vpop.f32.mrb[0].mxu0
          %v724 = vadd.f32 %v650, %v723
          %v725 = vpop.f32.mrb[0].mxu0
          %726 = vmatprep.mubr.f32.mxu0 0.0
          %727 = vmatmul.mubr.f32.gmra.mrb[0].mxu0 %v615
          %v728 = vpop.f32.mrb[0].mxu0
          %v729 = vadd.f32 %v650, %v728
          %v730 = vpop.f32.mrb[0].mxu0
          %731 = vmatprep.mubr.f32.mxu0 0.0
          %732 = vmatmul.mubr.f32.gmra.mrb[0].mxu0 %v616
          %v733 = vpop.f32.mrb[0].mxu0
          %v734 = vadd.f32 %v650, %v733
          %v735 = vpop.f32.mrb[0].mxu0
          %736 = vmatprep.mubr.f32.mxu0 0.0
          %737 = vmatmul.mubr.f32.gmra.mrb[0].mxu0 %v617
          %v738 = vpop.f32.mrb[0].mxu0
          %v739 = vadd.f32 %v650, %v738
          %v740 = vpop.f32.mrb[0].mxu0
          %741 = vmatprep.mubr.f32.mxu0 0.0
          %742 = vmatmul.mubr.f32.gmra.mrb[0].mxu0 %v618
          %v743 = vpop.f32.mrb[0].mxu0
          %v744 = vadd.f32 %v650, %v743
          %v745 = vpop.f32.mrb[0].mxu0
          %746 = vmatprep.mubr.f32.mxu0 0.0
          %747 = vmatmul.mubr.f32.gmra.mrb[0].mxu0 %v619
          %v748 = vpop.f32.mrb[0].mxu0
          %v749 = vadd.f32 %v650, %v748
          %v750 = vpop.f32.mrb[0].mxu0
          %751 = vmatprep.mubr.f32.mxu0 0.0
          %752 = vmatmul.mubr.f32.gmra.mrb[0].mxu0 %v620
          %v753 = vpop.f32.mrb[0].mxu0
          %v754 = vadd.f32 %v650, %v753
          %v755 = vpop.f32.mrb[0].mxu0
          %756 = vmatprep.mubr.f32.mxu0 0.0
          %757 = vmatmul.mubr.f32.gmra.mrb[0].mxu0 %v621
          %v758 = vpop.f32.mrb[0].mxu0
          %v759 = vadd.f32 %v650, %v758
          %v760 = vpop.f32.mrb[0].mxu0
          %761 = vmatprep.mubr.f32.mxu0 0.0
          %762 = vmatmul.mubr.f32.gmra.mrb[0].mxu0 %v622
          %v763 = vpop.f32.mrb[0].mxu0
          %v764 = vadd.f32 %v650, %v763
          %v765 = vpop.f32.mrb[0].mxu0
          %766 = vmatprep.mubr.f32.mxu0 0.0
          %767 = vmatmul.mubr.f32.gmra.mrb[0].mxu0 %v623
          %v768 = vpop.f32.mrb[0].mxu0
          %v769 = vadd.f32 %v650, %v768
          %v770 = vpop.f32.mrb[0].mxu0
          %771 = vmatprep.mubr.f32.mxu0 0.0
          %772 = vmatmul.mubr.f32.gmra.mrb[0].mxu0 %v624
          %v773 = vpop.f32.mrb[0].mxu0
          %v774 = vadd.f32 %v650, %v773
          %v775 = vpop.f32.mrb[0].mxu0
          %776 = vmatprep.mubr.f32.mxu0 0.0
          %777 = vmatmul.mubr.f32.gmra.mrb[0].mxu0 %v625
          %v778 = vpop.f32.mrb[0].mxu0
          %v779 = vadd.f32 %v650, %v778
          %v780 = vpop.f32.mrb[0].mxu0
          %781 = vmatprep.mubr.f32.mxu0 0.0
          %782 = vmatmul.mubr.f32.gmra.mrb[0].mxu0 %v626
          %v783 = vpop.f32.mrb[0].mxu0
          %v784 = vadd.f32 %v650, %v783
          %v785 = vpop.f32.mrb[0].mxu0
          %786 = vmatprep.mubr.f32.mxu0 0.0
          %787 = vmatmul.mubr.f32.gmra.mrb[0].mxu0 %v627
          %v788 = vpop.f32.mrb[0].mxu0
          %v789 = vadd.f32 %v650, %v788
          %v790 = vpop.f32.mrb[0].mxu0
          %791 = vmatprep.mubr.f32.mxu0 0.0
          %792 = vmatmul.mubr.f32.gmra.mrb[0].mxu0 %v628
          %v793 = vpop.f32.mrb[0].mxu0
          %v794 = vadd.f32 %v650, %v793
          %v795 = vpop.f32.mrb[0].mxu0
          %796 = vdwg.mxu0
          %v797 = vrsqrt.pop %v719
          %v798 = vrsqrt.pop %v724
          %v799 = vrsqrt.pop %v729
          %v800 = vrsqrt.pop %v734
          %v801 = vrsqrt.pop %v739
          %v802 = vrsqrt.pop %v744
          %v803 = vrsqrt.pop %v749
          %v804 = vrsqrt.pop %v754
          %v805 = vrsqrt.pop %v759
          %v806 = vrsqrt.pop %v764
          %v807 = vrsqrt.pop %v769
          %v808 = vrsqrt.pop %v774
          %v809 = vrsqrt.pop %v779
          %v810 = vrsqrt.pop %v784
          %v811 = vrsqrt.pop %v789
          %v812 = vrsqrt.pop %v794
          %v813 = vmul.f32 %v597, %v797
          %v814 = vmul.f32 %v598, %v798
          %v815 = vmul.f32 %v599, %v799
          %v816 = vmul.f32 %v600, %v800
          %v817 = vmul.f32 %v601, %v801
          %v818 = vmul.f32 %v602, %v802
          %v819 = vmul.f32 %v603, %v803
          %v820 = vmul.f32 %v604, %v804
          %v821 = vmul.f32 %v605, %v805
          %v822 = vmul.f32 %v606, %v806
          %v823 = vmul.f32 %v607, %v807
          %v824 = vmul.f32 %v608, %v808
          %v825 = vmul.f32 %v609, %v809
          %v826 = vmul.f32 %v610, %v810
          %v827 = vmul.f32 %v611, %v811
          %v828 = vmul.f32 %v612, %v812
          %v829 = vld [vmem:[#allocation3] sm:$0x1]
          %s830 = vtos %v829
          %vm831 = vcmp.ge.f32.partialorder %v813, 0.0
          %vm832 = vcmp.ge.f32.partialorder %v814, 0.0
          %vm833 = vcmp.ge.f32.partialorder %v815, 0.0
          %vm834 = vcmp.ge.f32.partialorder %v816, 0.0
          %vm835 = vcmp.ge.f32.partialorder %v817, 0.0
          %vm836 = vcmp.ge.f32.partialorder %v818, 0.0
          %vm837 = vcmp.ge.f32.partialorder %v819, 0.0
          %vm838 = vcmp.ge.f32.partialorder %v820, 0.0
          %vm839 = vcmp.ge.f32.partialorder %v821, 0.0
          %vm840 = vcmp.ge.f32.partialorder %v822, 0.0
          %vm841 = vcmp.ge.f32.partialorder %v823, 0.0
          %vm842 = vcmp.ge.f32.partialorder %v824, 0.0
          %vm843 = vcmp.ge.f32.partialorder %v825, 0.0
          %vm844 = vcmp.ge.f32.partialorder %v826, 0.0
          %vm845 = vcmp.ge.f32.partialorder %v827, 0.0
          %vm846 = vcmp.ge.f32.partialorder %v828, 0.0
          %v847 = vstv %s830
          %v848 = vmul.f32 %v847, %v813
          %v849 = vmul.f32 %v847, %v814
          %v850 = vmul.f32 %v847, %v815
          %v851 = vmul.f32 %v847, %v816
          %v852 = vmul.f32 %v847, %v817
          %v853 = vmul.f32 %v847, %v818
          %v854 = vmul.f32 %v847, %v819
          %v855 = vmul.f32 %v847, %v820
          %v856 = vmul.f32 %v847, %v821
          %v857 = vmul.f32 %v847, %v822
          %v858 = vmul.f32 %v847, %v823
          %v859 = vmul.f32 %v847, %v824
          %v860 = vmul.f32 %v847, %v825
          %v861 = vmul.f32 %v847, %v826
          %v862 = vmul.f32 %v847, %v827
          %v863 = vmul.f32 %v847, %v828
          %v864 = vsel %vm831, %v813, %v848
          %v865 = vsel %vm832, %v814, %v849
          %v866 = vsel %vm833, %v815, %v850
          %v867 = vsel %vm834, %v816, %v851
          %v868 = vsel %vm835, %v817, %v852
          %v869 = vsel %vm836, %v818, %v853
          %v870 = vsel %vm837, %v819, %v854
          %v871 = vsel %vm838, %v820, %v855
          %v872 = vsel %vm839, %v821, %v856
          %v873 = vsel %vm840, %v822, %v857
          %v874 = vsel %vm841, %v823, %v858
          %v875 = vsel %vm842, %v824, %v859
          %v876 = vsel %vm843, %v825, %v860
          %v877 = vsel %vm844, %v826, %v861
          %v878 = vsel %vm845, %v827, %v862
          %v879 = vsel %vm846, %v828, %v863
          %880 = vst [vmem:[%s296] sm:$0xff] %v864
          %881 = vst [vmem:[%s296 + $0x8] sm:$0xff] %v865
          %882 = vst [vmem:[%s296 + $0x10] sm:$0xff] %v866
          %883 = vst [vmem:[%s296 + $0x18] sm:$0xff] %v867
          %884 = vst [vmem:[%s296 + $0x20] sm:$0xff] %v868
          %885 = vst [vmem:[%s296 + $0x28] sm:$0xff] %v869
          %886 = vst [vmem:[%s296 + $0x30] sm:$0xff] %v870
          %887 = vst [vmem:[%s296 + $0x38] sm:$0xff] %v871
          %888 = vst [vmem:[%s296 + $0x40] sm:$0xff] %v872
          %889 = vst [vmem:[%s296 + $0x48] sm:$0xff] %v873
          %890 = vst [vmem:[%s296 + $0x50] sm:$0xff] %v874
          %891 = vst [vmem:[%s296 + $0x58] sm:$0xff] %v875
          %892 = vst [vmem:[%s296 + $0x60] sm:$0xff] %v876
          %893 = vst [vmem:[%s296 + $0x68] sm:$0xff] %v877
          %894 = vst [vmem:[%s296 + $0x70] sm:$0xff] %v878
          %895 = vst [vmem:[%s296 + $0x78] sm:$0xff] %v879
        $region60: #{tpu_custom_call.1} parent=39 // pred_fallthru
          _
        %s896 = sand.u32 %s162, 1
        %s897 = scalar_lea.sflag [#allocation6], %s896
        %s898 = sand.u32 %s162, 1
        %s899 = smul.addr %s898, 128
        %s900 = scalar_lea.vmem [#allocation10], %s899
        // Predicated region
        $region61: #{tpu_custom_call.1} parent=39 // pred_check
          %p901 = pneg %p172
        $region62: #{tpu_custom_call.1} parent=39 // pred_check_branch
          %903 = sbr.rel (%p901) target = $region64
        $region63: #{tpu_custom_call.1} parent=39 // pred_region
          %s904 = smul.u32 16, %s29
          %s906 = ssub.s32 2048, 2048
          %907 = vsyncadd %s897, %s906
          %s908 = smul.addr %s904, 128
          %s909 = scalar_lea.hbm %s5, %s908
          %s910 = sshll.u32 %s900, 4
          %s911 = int_to_ptr.vmem [resolvable:$true] %s910
          %916 = dma.vmem_to_hbm [thread:$0]  %s911, 2048, %s909, %s897, 128, 128, 8
        $region64: #{tpu_custom_call.1} parent=39 // pred_fallthru
          _
      $region40: #{tpu_custom_call.1} parent=5 // pred_fallthru
        _
      %p917 = scmp.le.s32.totalorder 2, %s20
      // Predicated region
      $region65: #{tpu_custom_call.1} parent=5 // pred_check
        %p918 = pneg %p917
      $region66: #{tpu_custom_call.1} parent=5 // pred_check_branch
        %920 = sbr.rel (%p918) target = $region68
      $region67: #{tpu_custom_call.1} parent=5 // pred_region
        %s921 = ssub.s32 %s20, 2
        // Predicated region
        $region69: #{tpu_custom_call.1} parent=67 // pred_check
          %p922 = pneg %p178
        $region70: #{tpu_custom_call.1} parent=67 // pred_check_branch
          %924 = sbr.rel (%p922) target = $region72
        $region71: #{tpu_custom_call.1} parent=67 // pred_region
          %s925 = sand.u32 %s163, 1
          %s926 = scalar_lea.sflag [#allocation6], %s925
          %s927 = sand.u32 %s163, 1
          %s928 = smul.addr %s927, 128
          %s929 = scalar_lea.vmem [#allocation10], %s928
          %930 = dma.done %s926, 2048
        $region72: #{tpu_custom_call.1} parent=67 // pred_fallthru
          _
      $region68: #{tpu_custom_call.1} parent=5 // pred_fallthru
        _
    $region6: #{tpu_custom_call.1} parent=1 // loop_footer
      %s24 = sadd.s32 1, %s20
    $region7: #{tpu_custom_call.1} parent=1 // loop_footer_branch
      %19 = sbr.rel target = $region3
    $region8: #{tpu_custom_call.1} parent=1 // loop_exit
      _
    %931 = vsyncpa [#allocation5], 1
    %s932 = scalar_lea.sflag [#allocation5], 1
    %933 = vsyncpa %s932, 1
    %934 = vsyncpa [#allocation8], 1
    %935 = vsyncpa [#allocation6], 1
    %s936 = scalar_lea.sflag [#allocation6], 1
    %937 = vsyncpa %s936, 1

</llo_original>
